<compile_context>
chip_gen: v5e
topology: v5e:2x2
jax: 0.10.0
libtpu: 0.0.40
codegen_flags: <defaults>
</compile_context>

<pallas_src>
import functools

import jax
import jax.numpy as jnp
from jax.experimental import pallas as pl
from jax.experimental.pallas import tpu as pltpu

N_STATES = 4    # e.g. CartPole observation dim
N_ACTIONS = 2   # e.g. CartPole action count
HIDDEN = 64


def _round_up(x, m):
    return ((x + m - 1) // m) * m


# --------------------------------------------------------------------------
# Kernel
# --------------------------------------------------------------------------
def _actor_kernel(x_ref, w1_ref, b1_ref, w2_ref, b2_ref, w3_ref, b3_ref,
                  out_ref, *, paired, out_width):
    # ---- fc1 + ReLU (f32 MXU matmul; K = packed+padded state width).
    h1 = jnp.dot(x_ref[...], w1_ref[...],
                 preferred_element_type=jnp.float32) + b1_ref[...]
    h1 = jnp.maximum(h1, 0.0)

    # ---- fc2 + ReLU (bf16 inputs when enabled, f32 accumulate).
    h2 = jnp.dot(h1.astype(w2_ref.dtype), w2_ref[...],
                 preferred_element_type=jnp.float32) + b2_ref[...]
    h2 = jnp.maximum(h2, 0.0)

    # ---- fc3: when `paired`, W3 emits [logits | partner-logits] so the
    # 2-way softmax needs no cross-lane reductions at all.
    z = jnp.dot(h2.astype(w3_ref.dtype), w3_ref[...],
                preferred_element_type=jnp.float32) + b3_ref[...]

    if paired:
        logits = z[:, :out_width]          # logit of this lane's action
        partner = z[:, out_width:]         # logit of the other action
        m = jnp.maximum(logits, partner)
        e = jnp.exp(logits - m)
        ep = jnp.exp(partner - m)
        probs = e / (e + ep)               # exact divide: p in [0,1], pair sums to 1
    else:
        # General softmax over the action axis (only used with pack == 1).
        m = jnp.max(z, axis=-1, keepdims=True)
        e = jnp.exp(z - m)
        probs = e / jnp.sum(e, axis=-1, keepdims=True)   # exact divide

    out_ref[...] = probs.astype(out_ref.dtype)


# --------------------------------------------------------------------------
# One-time parameter packing (block-diagonal weights, tiled biases)
# --------------------------------------------------------------------------
def pack_params(params, *, pack=4, use_bf16=True):
    """Build block-diagonal / tiled parameters for `pack` rows per lane-row.

    pack=4 targets the 256-wide MXU (v6e / v7x); use pack=2 on v5e's 128-wide
    MXU.  Packing (and the paired-logit softmax) is only used for the 2-action
    case; otherwise we fall back to pack=1.
    """
    w1, b1, w2, b2, w3, b3 = params
    paired = (N_ACTIONS == 2)
    if not paired:
        pack = 1

    eye = jnp.eye(pack, dtype=jnp.float32)
    bd = lambda w: jnp.kron(eye, w)        # block-diagonal replication

    # fc1: block-diag (pack*S, pack*H), rows zero-padded to a multiple of 8.
    w1p = bd(w1)
    k1 = w1p.shape[0]
    k1p = _round_up(k1, 8)
    if k1p != k1:
        w1p = jnp.pad(w1p, ((0, k1p - k1), (0, 0)))
    b1p = jnp.tile(b1, (1, pack))

    # fc2: block-diag (pack*H, pack*H).
    w2p = bd(w2)
    b2p = jnp.tile(b2, (1, pack))

    # fc3: [logits | partner-logits] columns when N_ACTIONS == 2.
    if paired:
        w3p = jnp.concatenate([bd(w3), bd(w3[:, ::-1])], axis=1)
        b3p = jnp.concatenate(
            [jnp.tile(b3, (1, pack)), jnp.tile(b3[:, ::-1], (1, pack))], axis=1)
    else:
        w3p = bd(w3)
        b3p = jnp.tile(b3, (1, pack))

    if use_bf16:
        w2p = w2p.astype(jnp.bfloat16)
        w3p = w3p.astype(jnp.bfloat16)

    return dict(pack=pack, paired=paired, k1p=k1p,
                w1=w1p, b1=b1p, w2=w2p, b2=b2p, w3=w3p, b3=b3p)


# --------------------------------------------------------------------------
# Forward pass
# --------------------------------------------------------------------------
def actor_forward(x, p, *, b_tile=None, max_tile=4096):
    """Actor forward pass. x: (B, N_STATES) f32 -> (B, N_ACTIONS) f32 probs."""
    pack, paired, k1p = p["pack"], p["paired"], p["k1p"]
    B = x.shape[0]
    align = 8 * pack                      # packed tile rows must be x8 sublanes

    if b_tile is None:
        # Large tiles amortize the ~0.35us per-grid-step overhead; cap so the
        # grid keeps >= 2 steps (both v7x TensorCores get work) when possible.
        b_tile = min(max_tile, _round_up(B, align))
        if B > align:
            b_tile = min(b_tile, _round_up(pl.cdiv(B, 2), align))
    assert b_tile % align == 0, "batch tile must be a multiple of 8*pack rows"

    Bp = _round_up(B, b_tile)
    if Bp != B:
        x = jnp.pad(x, ((0, Bp - B), (0, 0)))   # padded rows sliced off below

    # Pack rows: (Bp, S) -> (Bp/pack, pack*S) (free, row-major), pad K to k1p.
    xm = x.reshape(Bp // pack, pack * N_STATES)
    if k1p != pack * N_STATES:
        xm = jnp.pad(xm, ((0, 0), (0, k1p - pack * N_STATES)))

    Mt = b_tile // pack                   # packed rows per grid step
    grid = (Bp // b_tile,)
    H = HIDDEN
    out_w = pack * N_ACTIONS
    w3_cols = p["w3"].shape[1]
    const = lambda i: (0, 0)              # weights/biases resident in VMEM

    kernel = functools.partial(_actor_kernel, paired=paired, out_width=out_w)

    out = pl.pallas_call(
        kernel,
        out_shape=jax.ShapeDtypeStruct((Bp // pack, out_w), jnp.float32),
        grid=grid,
        in_specs=[
            pl.BlockSpec((Mt, k1p), lambda i: (i, 0)),       # x: batch-tiled
            pl.BlockSpec((k1p, pack * H), const),            # w1 (block-diag)
            pl.BlockSpec((1, pack * H), const),              # b1
            pl.BlockSpec((pack * H, pack * H), const),       # w2 (block-diag)
            pl.BlockSpec((1, pack * H), const),              # b2
            pl.BlockSpec((pack * H, w3_cols), const),        # w3 (+ partner cols)
            pl.BlockSpec((1, w3_cols), const),               # b3
        ],
        out_specs=pl.BlockSpec((Mt, out_w), lambda i: (i, 0)),
        compiler_params=pltpu.CompilerParams(
            dimension_semantics=("parallel",)),              # megacore on v7x
    )(xm, p["w1"], p["b1"], p["w2"], p["b2"], p["w3"], p["b3"])

    # Free row-major reshape back to per-row probabilities.
    return out.reshape(Bp, N_ACTIONS)[:B]


# --------------------------------------------------------------------------
# Init / reference
# --------------------------------------------------------------------------
def init_params(key):
    """PyTorch nn.Linear-style init: U[-1/sqrt(fan_in), 1/sqrt(fan_in)]."""
    ks = jax.random.split(key, 6)

    def linear(kw, kb, fan_in, fan_out):
        bound = 1.0 / jnp.sqrt(fan_in)
        w = jax.random.uniform(kw, (fan_in, fan_out), jnp.float32, -bound, bound)
        b = jax.random.uniform(kb, (1, fan_out), jnp.float32, -bound, bound)
        return w, b

    w1, b1 = linear(ks[0], ks[1], N_STATES, HIDDEN)
    w2, b2 = linear(ks[2], ks[3], HIDDEN, HIDDEN)
    w3, b3 = linear(ks[4], ks[5], HIDDEN, N_ACTIONS)
    return (w1, b1, w2, b2, w3, b3)


def actor_ref(x, params):
    """Pure-JAX f32 reference matching the PyTorch module."""
    w1, b1, w2, b2, w3, b3 = params
    h1 = jnp.maximum(x @ w1 + b1, 0.0)
    h2 = jnp.maximum(h1 @ w2 + b2, 0.0)
    logits = h2 @ w3 + b3
    return jax.nn.softmax(logits, axis=-1)


if __name__ == "__main__":
    key = jax.random.PRNGKey(0)
    pkey, xkey = jax.random.split(key)
    params = init_params(pkey)

    # Small but non-trivial: B=50 with pack=4 gives b_tile=32 -> a 2-step grid,
    # batch padding, row-packing, and resident-weight BlockSpecs.
    B = 50
    x = jax.random.normal(xkey, (B, N_STATES), dtype=jnp.float32)

    # bf16 MXU path (default).
    packed = pack_params(params, pack=4, use_bf16=True)
    probs = jax.block_until_ready(actor_forward(x, packed))

    ref = actor_ref(x, params)
    assert probs.shape == (B, N_ACTIONS)
    # bf16 fc2/fc3 inputs -> compare to f32 ref with a relaxed tolerance.
    assert jnp.allclose(probs, ref, atol=2e-2, rtol=2e-2)
    # Exact-divide softmax: valid Categorical parameters.
    assert jnp.allclose(jnp.sum(probs, axis=-1), 1.0, atol=1e-5)
    assert jnp.all(probs >= 0.0) and jnp.all(probs <= 1.0)

    # f32 path: tight tolerance against the reference.
    packed32 = pack_params(params, pack=4, use_bf16=False)
    probs32 = jax.block_until_ready(actor_forward(x, packed32))
    assert jnp.allclose(probs32, ref, atol=1e-5, rtol=1e-5)

    # TODO(synk): Categorical distribution object (sampling/log_prob) has no
    # Pallas equivalent; the kernel returns its probability parameters.
    print("KERNEL_OK")
</pallas_src>

<mosaic_0001>
module attributes {stable_mosaic.version = 11 : i64} {
  func.func @_actor_kernel(%arg0: i32, %arg1: memref<8x16xf32, #tpu.memory_space<vmem>>, %arg2: memref<16x256xf32, #tpu.memory_space<vmem>>, %arg3: memref<1x256xf32, #tpu.memory_space<vmem>>, %arg4: memref<256x256xbf16, #tpu.memory_space<vmem>>, %arg5: memref<1x256xf32, #tpu.memory_space<vmem>>, %arg6: memref<256x16xbf16, #tpu.memory_space<vmem>>, %arg7: memref<1x16xf32, #tpu.memory_space<vmem>>, %arg8: memref<8x8xf32, #tpu.memory_space<vmem>>) attributes {dimension_semantics = [#tpu.dimension_semantics<parallel>], iteration_bounds = array<i64: 2>, scalar_prefetch = 0 : i64, scratch_operands = 0 : i64, tpu.core_type = #tpu.core_type<tc>, window_params = [{transform_indices = @transform_0, window_bounds = array<i64: 8, 16>}, {pipeline_mode = #tpu.pipeline_mode<synchronous>, transform_indices = @transform_1, window_bounds = array<i64: 16, 256>}, {pipeline_mode = #tpu.pipeline_mode<synchronous>, transform_indices = @transform_2, window_bounds = array<i64: 1, 256>}, {pipeline_mode = #tpu.pipeline_mode<synchronous>, transform_indices = @transform_3, window_bounds = array<i64: 256, 256>}, {pipeline_mode = #tpu.pipeline_mode<synchronous>, transform_indices = @transform_4, window_bounds = array<i64: 1, 256>}, {pipeline_mode = #tpu.pipeline_mode<synchronous>, transform_indices = @transform_5, window_bounds = array<i64: 256, 16>}, {pipeline_mode = #tpu.pipeline_mode<synchronous>, transform_indices = @transform_6, window_bounds = array<i64: 1, 16>}, {transform_indices = @transform_7, window_bounds = array<i64: 8, 8>}]} {
    %c0 = arith.constant 0 : index
    %c0_0 = arith.constant 0 : index
    %0 = vector.load %arg1[%c0, %c0_0] : memref<8x16xf32, #tpu.memory_space<vmem>>, vector<8x16xf32>
    %c0_1 = arith.constant 0 : index
    %c0_2 = arith.constant 0 : index
    %1 = vector.load %arg2[%c0_1, %c0_2] : memref<16x256xf32, #tpu.memory_space<vmem>>, vector<16x256xf32>
    %cst = arith.constant dense<0.000000e+00> : vector<8x256xf32>
    %2 = tpu.matmul %0, %1, %cst {dimension_numbers = #tpu.dot_dimension_numbers<[1], [0], [0], [1], [0, 0, 1, 1], [], []>} : vector<8x16xf32>, vector<16x256xf32>, vector<8x256xf32> -> vector<8x256xf32>
    %c0_3 = arith.constant 0 : index
    %c0_4 = arith.constant 0 : index
    %3 = vector.load %arg3[%c0_3, %c0_4] : memref<1x256xf32, #tpu.memory_space<vmem>>, vector<1x256xf32>
    %4 = vector.broadcast %3 : vector<1x256xf32> to vector<8x256xf32>
    %5 = arith.addf %2, %4 : vector<8x256xf32>
    %cst_5 = arith.constant 0.000000e+00 : f32
    %6 = vector.broadcast %cst_5 : f32 to vector<8x256xf32>
    %7 = arith.maximumf %5, %6 : vector<8x256xf32>
    %8 = arith.truncf %7 : vector<8x256xf32> to vector<8x256xbf16>
    %c0_6 = arith.constant 0 : index
    %c0_7 = arith.constant 0 : index
    %9 = vector.load %arg4[%c0_6, %c0_7] : memref<256x256xbf16, #tpu.memory_space<vmem>>, vector<256x256xbf16>
    %cst_8 = arith.constant dense<0.000000e+00> : vector<8x256xf32>
    %10 = tpu.matmul %8, %9, %cst_8 {dimension_numbers = #tpu.dot_dimension_numbers<[1], [0], [0], [1], [0, 0, 1, 1], [], []>} : vector<8x256xbf16>, vector<256x256xbf16>, vector<8x256xf32> -> vector<8x256xf32>
    %c0_9 = arith.constant 0 : index
    %c0_10 = arith.constant 0 : index
    %11 = vector.load %arg5[%c0_9, %c0_10] : memref<1x256xf32, #tpu.memory_space<vmem>>, vector<1x256xf32>
    %12 = vector.broadcast %11 : vector<1x256xf32> to vector<8x256xf32>
    %13 = arith.addf %10, %12 : vector<8x256xf32>
    %cst_11 = arith.constant 0.000000e+00 : f32
    %14 = vector.broadcast %cst_11 : f32 to vector<8x256xf32>
    %15 = arith.maximumf %13, %14 : vector<8x256xf32>
    %16 = arith.truncf %15 : vector<8x256xf32> to vector<8x256xbf16>
    %c0_12 = arith.constant 0 : index
    %c0_13 = arith.constant 0 : index
    %17 = vector.load %arg6[%c0_12, %c0_13] : memref<256x16xbf16, #tpu.memory_space<vmem>>, vector<256x16xbf16>
    %cst_14 = arith.constant dense<0.000000e+00> : vector<8x16xf32>
    %18 = tpu.matmul %16, %17, %cst_14 {dimension_numbers = #tpu.dot_dimension_numbers<[1], [0], [0], [1], [0, 0, 1, 1], [], []>} : vector<8x256xbf16>, vector<256x16xbf16>, vector<8x16xf32> -> vector<8x16xf32>
    %c0_15 = arith.constant 0 : index
    %c0_16 = arith.constant 0 : index
    %19 = vector.load %arg7[%c0_15, %c0_16] : memref<1x16xf32, #tpu.memory_space<vmem>>, vector<1x16xf32>
    %20 = vector.broadcast %19 : vector<1x16xf32> to vector<8x16xf32>
    %21 = arith.addf %18, %20 : vector<8x16xf32>
    %22 = vector.extract_strided_slice %21 {offsets = [0, 0], sizes = [8, 8], strides = [1, 1]} : vector<8x16xf32> to vector<8x8xf32>
    %23 = vector.extract_strided_slice %21 {offsets = [0, 8], sizes = [8, 8], strides = [1, 1]} : vector<8x16xf32> to vector<8x8xf32>
    %24 = arith.maximumf %22, %23 : vector<8x8xf32>
    %25 = arith.subf %22, %24 : vector<8x8xf32>
    %26 = math.exp %25 : vector<8x8xf32>
    %27 = arith.subf %23, %24 : vector<8x8xf32>
    %28 = math.exp %27 : vector<8x8xf32>
    %29 = arith.addf %26, %28 : vector<8x8xf32>
    %30 = arith.divf %26, %29 : vector<8x8xf32>
    %c0_17 = arith.constant 0 : index
    %c0_18 = arith.constant 0 : index
    %31 = vector.load %arg8[%c0_17, %c0_18] : memref<8x8xf32, #tpu.memory_space<vmem>>, vector<8x8xf32>
    tpu.vector_store %arg8[%c0_17, %c0_18], %30 {strides = array<i32>} : memref<8x8xf32, #tpu.memory_space<vmem>>, vector<8x8xf32>,
    return
  }
  func.func @transform_0(%arg0: i32) -> (i32, i32) {
    %c0_i32 = arith.constant 0 : i32
    %c0_i32_0 = arith.constant 0 : i32
    return %arg0, %c0_i32 : i32, i32
  }
  func.func @transform_1(%arg0: i32) -> (i32, i32) {
    %c0_i32 = arith.constant 0 : i32
    %c0_i32_0 = arith.constant 0 : i32
    %c0_i32_1 = arith.constant 0 : i32
    return %c0_i32, %c0_i32_0 : i32, i32
  }
  func.func @transform_2(%arg0: i32) -> (i32, i32) {
    %c0_i32 = arith.constant 0 : i32
    %c0_i32_0 = arith.constant 0 : i32
    %c0_i32_1 = arith.constant 0 : i32
    return %c0_i32, %c0_i32_0 : i32, i32
  }
  func.func @transform_3(%arg0: i32) -> (i32, i32) {
    %c0_i32 = arith.constant 0 : i32
    %c0_i32_0 = arith.constant 0 : i32
    %c0_i32_1 = arith.constant 0 : i32
    return %c0_i32, %c0_i32_0 : i32, i32
  }
  func.func @transform_4(%arg0: i32) -> (i32, i32) {
    %c0_i32 = arith.constant 0 : i32
    %c0_i32_0 = arith.constant 0 : i32
    %c0_i32_1 = arith.constant 0 : i32
    return %c0_i32, %c0_i32_0 : i32, i32
  }
  func.func @transform_5(%arg0: i32) -> (i32, i32) {
    %c0_i32 = arith.constant 0 : i32
    %c0_i32_0 = arith.constant 0 : i32
    %c0_i32_1 = arith.constant 0 : i32
    return %c0_i32, %c0_i32_0 : i32, i32
  }
  func.func @transform_6(%arg0: i32) -> (i32, i32) {
    %c0_i32 = arith.constant 0 : i32
    %c0_i32_0 = arith.constant 0 : i32
    %c0_i32_1 = arith.constant 0 : i32
    return %c0_i32, %c0_i32_0 : i32, i32
  }
  func.func @transform_7(%arg0: i32) -> (i32, i32) {
    %c0_i32 = arith.constant 0 : i32
    %c0_i32_0 = arith.constant 0 : i32
    return %arg0, %c0_i32 : i32, i32
  }
}

</mosaic_0001>

<llo_original>
// kernel: tpu_custom_call.1
$region0: #{tpu_custom_call.1}
  #allocation0 [shape = 'u32[]', space=smem, size = 0x4, offset = 0x4, fixed_abs, tag = 'smem constant byte address 0x4 - core index']
  #allocation1 [shape = 'u32[72,128]{1,0:T(1,128)}', space=vmem, size = 0x9000, scoped, tag = 'internal scratch']
  %s0 = inlined_call_operand.vmem [shape: f32[16,16], index: 0, kind: input, shape index: {}]
  %s1 = inlined_call_operand.vmem [shape: f32[16,256], index: 1, kind: input, shape index: {}]
  %s2 = inlined_call_operand.vmem [shape: f32[1,256], index: 2, kind: input, shape index: {}]
  %s3 = inlined_call_operand.hbm [shape: bf16[256,256], index: 3, kind: input, shape index: {}]
  %s4 = inlined_call_operand.vmem [shape: f32[1,256], index: 4, kind: input, shape index: {}]
  %s5 = inlined_call_operand.vmem [shape: bf16[256,16], index: 5, kind: input, shape index: {}]
  %s6 = inlined_call_operand.vmem [shape: f32[1,16], index: 6, kind: input, shape index: {}]
  %s7 = inlined_call_operand.vmem [shape: f32[16,8], index: 7, kind: output, shape index: {}]
  %s8 = sld [smem:[#allocation0]]
  $region65: #{tpu_custom_call.1} parent=0
    _
  %s10 = ssub.s32 1, %s8
  %s11 = scalar_select 0, %s10, %s8
  $region1: #{tpu_custom_call.1} parent=0
    #allocation2 [shape = 'u8[131072]{0}', space=vmem, size = 0x20000, scoped, tag = 'input window, operand 3, single buffered']
    #allocation3 [shape = 's32[2]{0}', space=sflag, size = 0x8, scoped, tag = 'scoped memory for tpu_custom_call.1']
    %12 = vsyncpa [#allocation3], 0
    loop: start=0, step=1, limit=4
    $region2: #{tpu_custom_call.1} parent=1 // loop_pre_header
      _
    $region3: #{tpu_custom_call.1} parent=1 // loop_header
      %s14 = sphi 0, %s18
      %p15 = scmp.ge.s32.totalorder %s14, 4
      %s24 = sphi 0, %s26
      %s27 = sphi 0, %s24
      %s28 = sphi 0, %s27
      %s44 = sphi 0, %s28
      %s48 = sphi 0, %s48
      %s50 = sphi 0, %s48
      %s51 = sphi 0, %s50
      %s65 = sphi 0, %s51
      %s69 = sphi 0, %s69
      %s71 = sphi 0, %s69
      %s72 = sphi 0, %s71
      %s86 = sphi 0, %s72
      %s90 = sphi 0, %s90
      %s92 = sphi 0, %s90
      %s93 = sphi 0, %s92
      %s107 = sphi 0, %s93
      %s111 = sphi 0, %s111
      %s113 = sphi 0, %s111
      %s114 = sphi 0, %s113
      %s128 = sphi 0, %s114
      %s132 = sphi 0, %s132
      %s134 = sphi 0, %s132
      %s135 = sphi 0, %s134
      %s149 = sphi 0, %s135
      %s153 = sphi 0, %s153
      %s155 = sphi 0, %s153
      %s156 = sphi 0, %s155
      %s170 = sphi 0, %s156
      %s176 = sphi 0, %s178
      %s179 = sphi 0, %s176
      %s180 = sphi 0, %s179
      %s196 = sphi 0, %s180
    $region4: #{tpu_custom_call.1} parent=1 // loop_header_branch
      %17 = sbr.rel (%p15) target = $region8
    $region5: #{tpu_custom_call.1} parent=1 // loop_body
      %s19 = ssub.s32 %s14, 1
      %s20 = ssub.s32 %s14, 2
      %s21 = sadd.s32 %s14, 1
      %s22 = ssub.s32 %s14, %s21
      %p23 = scmp.eq.s32.totalorder %s22, 0
      %s25 = sadd.s32 %s24, 1
      %s26 = scalar_select %p23, %s24, %s25
      %p29 = pneg %p23
      %p30 = scmp.eq.s32.totalorder %s14, 1
      %p31 = por %p29, %p30
      %p32 = scmp.ne.s32.totalorder %s24, %s27
      %p33 = scmp.eq.s32.totalorder %s14, 0
      %p34 = por %p32, %p33
      %p35 = scmp.ne.s32.totalorder %s24, %s27
      %p36 = scmp.eq.s32.totalorder %s19, 1
      %p37 = por %p35, %p36
      %p38 = scmp.ne.s32.totalorder %s27, %s28
      %p39 = scmp.eq.s32.totalorder %s19, 0
      %p40 = por %p38, %p39
      %p41 = scmp.ne.s32.totalorder %s27, %s28
      %p42 = scmp.eq.s32.totalorder %s20, 1
      %p43 = por %p41, %p42
      %p45 = scmp.ne.s32.totalorder %s28, %s44
      %p46 = scmp.eq.s32.totalorder %s20, 0
      %p47 = por %p45, %p46
      %s49 = sadd.s32 %s48, 1
      %p52 = scmp.eq.s32.totalorder %s14, 1
      %p53 = scmp.ne.s32.totalorder %s48, %s50
      %p54 = scmp.eq.s32.totalorder %s14, 0
      %p55 = por %p53, %p54
      %p56 = scmp.ne.s32.totalorder %s48, %s50
      %p57 = scmp.eq.s32.totalorder %s19, 1
      %p58 = por %p56, %p57
      %p59 = scmp.ne.s32.totalorder %s50, %s51
      %p60 = scmp.eq.s32.totalorder %s19, 0
      %p61 = por %p59, %p60
      %p62 = scmp.ne.s32.totalorder %s50, %s51
      %p63 = scmp.eq.s32.totalorder %s20, 1
      %p64 = por %p62, %p63
      %p66 = scmp.ne.s32.totalorder %s51, %s65
      %p67 = scmp.eq.s32.totalorder %s20, 0
      %p68 = por %p66, %p67
      %s70 = sadd.s32 %s69, 1
      %p73 = scmp.eq.s32.totalorder %s14, 1
      %p74 = scmp.ne.s32.totalorder %s69, %s71
      %p75 = scmp.eq.s32.totalorder %s14, 0
      %p76 = por %p74, %p75
      %p77 = scmp.ne.s32.totalorder %s69, %s71
      %p78 = scmp.eq.s32.totalorder %s19, 1
      %p79 = por %p77, %p78
      %p80 = scmp.ne.s32.totalorder %s71, %s72
      %p81 = scmp.eq.s32.totalorder %s19, 0
      %p82 = por %p80, %p81
      %p83 = scmp.ne.s32.totalorder %s71, %s72
      %p84 = scmp.eq.s32.totalorder %s20, 1
      %p85 = por %p83, %p84
      %p87 = scmp.ne.s32.totalorder %s72, %s86
      %p88 = scmp.eq.s32.totalorder %s20, 0
      %p89 = por %p87, %p88
      %s91 = sadd.s32 %s90, 1
      %p94 = scmp.eq.s32.totalorder %s14, 1
      %p95 = scmp.ne.s32.totalorder %s90, %s92
      %p96 = scmp.eq.s32.totalorder %s14, 0
      %p97 = por %p95, %p96
      %p98 = scmp.ne.s32.totalorder %s90, %s92
      %p99 = scmp.eq.s32.totalorder %s19, 1
      %p100 = por %p98, %p99
      %p101 = scmp.ne.s32.totalorder %s92, %s93
      %p102 = scmp.eq.s32.totalorder %s19, 0
      %p103 = por %p101, %p102
      %p104 = scmp.ne.s32.totalorder %s92, %s93
      %p105 = scmp.eq.s32.totalorder %s20, 1
      %p106 = por %p104, %p105
      %p108 = scmp.ne.s32.totalorder %s93, %s107
      %p109 = scmp.eq.s32.totalorder %s20, 0
      %p110 = por %p108, %p109
      %s112 = sadd.s32 %s111, 1
      %p115 = scmp.eq.s32.totalorder %s14, 1
      %p116 = scmp.ne.s32.totalorder %s111, %s113
      %p117 = scmp.eq.s32.totalorder %s14, 0
      %p118 = por %p116, %p117
      %p119 = scmp.ne.s32.totalorder %s111, %s113
      %p120 = scmp.eq.s32.totalorder %s19, 1
      %p121 = por %p119, %p120
      %p122 = scmp.ne.s32.totalorder %s113, %s114
      %p123 = scmp.eq.s32.totalorder %s19, 0
      %p124 = por %p122, %p123
      %p125 = scmp.ne.s32.totalorder %s113, %s114
      %p126 = scmp.eq.s32.totalorder %s20, 1
      %p127 = por %p125, %p126
      %p129 = scmp.ne.s32.totalorder %s114, %s128
      %p130 = scmp.eq.s32.totalorder %s20, 0
      %p131 = por %p129, %p130
      %s133 = sadd.s32 %s132, 1
      %p136 = scmp.eq.s32.totalorder %s14, 1
      %p137 = scmp.ne.s32.totalorder %s132, %s134
      %p138 = scmp.eq.s32.totalorder %s14, 0
      %p139 = por %p137, %p138
      %p140 = scmp.ne.s32.totalorder %s132, %s134
      %p141 = scmp.eq.s32.totalorder %s19, 1
      %p142 = por %p140, %p141
      %p143 = scmp.ne.s32.totalorder %s134, %s135
      %p144 = scmp.eq.s32.totalorder %s19, 0
      %p145 = por %p143, %p144
      %p146 = scmp.ne.s32.totalorder %s134, %s135
      %p147 = scmp.eq.s32.totalorder %s20, 1
      %p148 = por %p146, %p147
      %p150 = scmp.ne.s32.totalorder %s135, %s149
      %p151 = scmp.eq.s32.totalorder %s20, 0
      %p152 = por %p150, %p151
      %s154 = sadd.s32 %s153, 1
      %p157 = scmp.eq.s32.totalorder %s14, 1
      %p158 = scmp.ne.s32.totalorder %s153, %s155
      %p159 = scmp.eq.s32.totalorder %s14, 0
      %p160 = por %p158, %p159
      %p161 = scmp.ne.s32.totalorder %s153, %s155
      %p162 = scmp.eq.s32.totalorder %s19, 1
      %p163 = por %p161, %p162
      %p164 = scmp.ne.s32.totalorder %s155, %s156
      %p165 = scmp.eq.s32.totalorder %s19, 0
      %p166 = por %p164, %p165
      %p167 = scmp.ne.s32.totalorder %s155, %s156
      %p168 = scmp.eq.s32.totalorder %s20, 1
      %p169 = por %p167, %p168
      %p171 = scmp.ne.s32.totalorder %s156, %s170
      %p172 = scmp.eq.s32.totalorder %s20, 0
      %p173 = por %p171, %p172
      %s174 = ssub.s32 %s14, %s21
      %p175 = scmp.eq.s32.totalorder %s174, 0
      %s177 = sadd.s32 %s176, 1
      %s178 = scalar_select %p175, %s176, %s177
      %p181 = pneg %p175
      %p182 = scmp.eq.s32.totalorder %s14, 1
      %p183 = por %p181, %p182
      %p184 = scmp.ne.s32.totalorder %s176, %s179
      %p185 = scmp.eq.s32.totalorder %s14, 0
      %p186 = por %p184, %p185
      %p187 = scmp.ne.s32.totalorder %s176, %s179
      %p188 = scmp.eq.s32.totalorder %s19, 1
      %p189 = por %p187, %p188
      %p190 = scmp.ne.s32.totalorder %s179, %s180
      %p191 = scmp.eq.s32.totalorder %s19, 0
      %p192 = por %p190, %p191
      %p193 = scmp.ne.s32.totalorder %s179, %s180
      %p194 = scmp.eq.s32.totalorder %s20, 1
      %p195 = por %p193, %p194
      %p197 = scmp.ne.s32.totalorder %s180, %s196
      %p198 = scmp.eq.s32.totalorder %s20, 0
      %p199 = por %p197, %p198
      %p200 = scmp.le.s32.totalorder 1, %s14
      %p201 = scmp.lt.s32.totalorder %s14, 3
      %p202 = pnand %p200, %p201
      %p203 = pneg %p202
      // Predicated region
      $region9: #{tpu_custom_call.1} parent=5 // pred_check
        _
      $region10: #{tpu_custom_call.1} parent=5 // pred_check_branch
        %205 = sbr.rel (%p202) target = $region12
      $region11: #{tpu_custom_call.1} parent=5 // pred_region
        %s206 = ssub.s32 %s14, 1
        // Predicated region
        $region13: #{tpu_custom_call.1} parent=11 // pred_check
          %p207 = pneg %p61
        $region14: #{tpu_custom_call.1} parent=11 // pred_check_branch
          %209 = sbr.rel (%p207) target = $region16
        $region15: #{tpu_custom_call.1} parent=11 // pred_region
          _
        $region16: #{tpu_custom_call.1} parent=11 // pred_fallthru
          _
        // Predicated region
        $region17: #{tpu_custom_call.1} parent=11 // pred_check
          %p210 = pneg %p82
        $region18: #{tpu_custom_call.1} parent=11 // pred_check_branch
          %212 = sbr.rel (%p210) target = $region20
        $region19: #{tpu_custom_call.1} parent=11 // pred_region
          _
        $region20: #{tpu_custom_call.1} parent=11 // pred_fallthru
          _
        // Predicated region
        $region21: #{tpu_custom_call.1} parent=11 // pred_check
          %p213 = pneg %p103
        $region22: #{tpu_custom_call.1} parent=11 // pred_check_branch
          %215 = sbr.rel (%p213) target = $region24
        $region23: #{tpu_custom_call.1} parent=11 // pred_region
          %217 = vsyncadd [#allocation3], 0
          %s218 = sshll.u32 %s3, 4
          %s219 = int_to_ptr.hbm [resolvable:$true] %s218
          %s220 = sshll.u32 [#allocation2], 4
          %s221 = int_to_ptr.vmem [resolvable:$true] %s220
          %226 = dma.hbm_to_vmem [thread:$0]  %s219, 4096, %s221, [#allocation3], 128, 128, 8
        $region24: #{tpu_custom_call.1} parent=11 // pred_fallthru
          _
        // Predicated region
        $region25: #{tpu_custom_call.1} parent=11 // pred_check
          %p227 = pneg %p124
        $region26: #{tpu_custom_call.1} parent=11 // pred_check_branch
          %229 = sbr.rel (%p227) target = $region28
        $region27: #{tpu_custom_call.1} parent=11 // pred_region
          _
        $region28: #{tpu_custom_call.1} parent=11 // pred_fallthru
          _
        // Predicated region
        $region29: #{tpu_custom_call.1} parent=11 // pred_check
          %p230 = pneg %p145
        $region30: #{tpu_custom_call.1} parent=11 // pred_check_branch
          %232 = sbr.rel (%p230) target = $region32
        $region31: #{tpu_custom_call.1} parent=11 // pred_region
          _
        $region32: #{tpu_custom_call.1} parent=11 // pred_fallthru
          _
        // Predicated region
        $region33: #{tpu_custom_call.1} parent=11 // pred_check
          %p233 = pneg %p166
        $region34: #{tpu_custom_call.1} parent=11 // pred_check_branch
          %235 = sbr.rel (%p233) target = $region36
        $region35: #{tpu_custom_call.1} parent=11 // pred_region
          _
        $region36: #{tpu_custom_call.1} parent=11 // pred_fallthru
          _
      $region12: #{tpu_custom_call.1} parent=5 // pred_fallthru
        _
      %p236 = scmp.lt.s32.totalorder %s14, 2
      // Predicated region
      $region37: #{tpu_custom_call.1} parent=5 // pred_check
        %p237 = pneg %p236
      $region38: #{tpu_custom_call.1} parent=5 // pred_check_branch
        %239 = sbr.rel (%p237) target = $region40
      $region39: #{tpu_custom_call.1} parent=5 // pred_region
        // Predicated region
        $region41: #{tpu_custom_call.1} parent=39 // pred_check
          %p240 = pneg %p34
        $region42: #{tpu_custom_call.1} parent=39 // pred_check_branch
          %242 = sbr.rel (%p240) target = $region44
        $region43: #{tpu_custom_call.1} parent=39 // pred_region
          %p243 = scmp.lt.s32.totalorder %s14, 1
          %s244 = scalar_select %p243, %s14, 1
          %s245 = smul.addr %s244, 8
          %s246 = scalar_lea.vmem %s0, %s245
        $region44: #{tpu_custom_call.1} parent=39 // pred_fallthru
          _
      $region40: #{tpu_custom_call.1} parent=5 // pred_fallthru
        _
      %p247 = scmp.le.s32.totalorder 1, %s14
      %p248 = scmp.lt.s32.totalorder %s14, 3
      %p249 = pnand %p247, %p248
      %p250 = pneg %p249
      // Predicated region
      $region45: #{tpu_custom_call.1} parent=5 // pred_check
        _
      $region46: #{tpu_custom_call.1} parent=5 // pred_check_branch
        %252 = sbr.rel (%p249) target = $region48
      $region47: #{tpu_custom_call.1} parent=5 // pred_region
        %s253 = ssub.s32 %s14, 1
        // Predicated region
        $region49: #{tpu_custom_call.1} parent=47 // pred_check
          %p254 = pneg %p103
        $region50: #{tpu_custom_call.1} parent=47 // pred_check_branch
          %256 = sbr.rel (%p254) target = $region52
        $region51: #{tpu_custom_call.1} parent=47 // pred_region
          %258 = dma.done [#allocation3], 4096
        $region52: #{tpu_custom_call.1} parent=47 // pred_fallthru
          _
        %p259 = scmp.lt.s32.totalorder %s19, 1
        %s260 = scalar_select %p259, %s19, 1
        %s261 = smul.addr %s260, 8
        %s262 = scalar_lea.vmem %s0, %s261
        %p263 = pneg %p40
        %p264 = pneg %p37
        %p265 = pneg %p61
        %p266 = pneg %p58
        %p267 = pneg %p82
        %p268 = pneg %p79
        %p269 = pneg %p103
        %p270 = pneg %p100
        %p271 = pneg %p124
        %p272 = pneg %p121
        %p273 = pneg %p145
        %p274 = pneg %p142
        %p275 = pneg %p166
        %p276 = pneg %p163
        %p277 = pneg %p192
        %p278 = pneg %p189
        %p279 = scmp.lt.s32.totalorder %s19, 1
        %s280 = scalar_select %p279, %s19, 1
        %s281 = smul.addr %s280, 8
        %s282 = scalar_lea.vmem %s7, %s281
        %p283 = scmp.lt.s32.totalorder %s19, 1
        %s284 = scalar_select %p283, %s19, 1
        %s285 = smul.addr %s284, 8
        %s286 = scalar_lea.vmem %s0, %s285
        %p287 = scmp.lt.s32.totalorder %s19, 1
        %s288 = scalar_select %p287, %s19, 1
        %s289 = smul.addr %s288, 8
        %s290 = scalar_lea.vmem %s7, %s289
        %v291 = vld [vmem:[%s286] sm:$0xff]
        %v292 = vld [vmem:[%s1] sm:$0xff]
        %v293 = vld [vmem:[%s1 + $0x8] sm:$0xff]
        %v294 = vld [vmem:[%s1 + $0x10] sm:$0xff]
        %v295 = vld [vmem:[%s1 + $0x18] sm:$0xff]
        %v296 = vld [vmem:[%s2] sm:$0x3]
        %v298 = vperm.slane %v296, 0
        %v299 = vperm.slane %v296, 1
        %vm302 = vcmask 130048
        %v304 = vsel %vm302, %v291, 0
        %306 = vmatpush.msra.mxu0 0.0
        %307 = vmatpush.msra.mxu0 0.0
        %308 = vmatpush.msra.mxu0 0.0
        %309 = vmatpush.msra.mxu0 0.0
        %310 = vmatpush.msra.mxu0 0.0
        %311 = vmatpush.msra.mxu0 0.0
        %312 = vmatpush.msra.mxu0 0.0
        %313 = vmatpush.msra.mxu0 0.0
        %314 = vmatpush.msra.mxu0 0.0
        %315 = vmatpush.msra.mxu0 0.0
        %316 = vmatpush.msra.mxu0 0.0
        %317 = vmatpush.msra.mxu0 0.0
        %318 = vmatpush.msra.mxu0 0.0
        %319 = vmatpush.msra.mxu0 0.0
        %320 = vmatpush.msra.mxu0 %v294
        %321 = vmatpush.msra.mxu0 %v292
        %322 = vmatmul.f32.gmra.mxu0 %v304
        %v323 = vpop.f32.mrf.mxu0
        %v324 = vadd.f32 %v298, %v323
        %325 = vdwg.mxu0
        %326 = vmatpush.msra.mxu0 0.0
        %327 = vmatpush.msra.mxu0 0.0
        %328 = vmatpush.msra.mxu0 0.0
        %329 = vmatpush.msra.mxu0 0.0
        %330 = vmatpush.msra.mxu0 0.0
        %331 = vmatpush.msra.mxu0 0.0
        %332 = vmatpush.msra.mxu0 0.0
        %333 = vmatpush.msra.mxu0 0.0
        %334 = vmatpush.msra.mxu0 0.0
        %335 = vmatpush.msra.mxu0 0.0
        %336 = vmatpush.msra.mxu0 0.0
        %337 = vmatpush.msra.mxu0 0.0
        %338 = vmatpush.msra.mxu0 0.0
        %339 = vmatpush.msra.mxu0 0.0
        %340 = vmatpush.msra.mxu0 %v295
        %341 = vmatpush.msra.mxu0 %v293
        %342 = vmatmul.f32.gmra.mxu0 %v304
        %v343 = vpop.f32.mrf.mxu0
        %v344 = vadd.f32 %v299, %v343
        %345 = vdwg.mxu0
        %v346 = vmax.f32 %v324, 0.0
        %v347 = vmax.f32 %v344, 0.0
        %v348 = vpack.c.bf16 %v346, %v346
        %v349 = vpack.c.bf16 %v347, %v347
        %v350 = vld [vmem:[#allocation2] sm:$0xff]
        %v351 = vld [vmem:[#allocation2 + $0x8] sm:$0xff]
        %v352 = vld [vmem:[#allocation2 + $0x10] sm:$0xff]
        %v353 = vld [vmem:[#allocation2 + $0x18] sm:$0xff]
        %v354 = vld [vmem:[#allocation2 + $0x20] sm:$0xff]
        %v355 = vld [vmem:[#allocation2 + $0x28] sm:$0xff]
        %v356 = vld [vmem:[#allocation2 + $0x30] sm:$0xff]
        %v357 = vld [vmem:[#allocation2 + $0x38] sm:$0xff]
        %v358 = vld [vmem:[#allocation2 + $0x40] sm:$0xff]
        %v359 = vld [vmem:[#allocation2 + $0x48] sm:$0xff]
        %v360 = vld [vmem:[#allocation2 + $0x50] sm:$0xff]
        %v361 = vld [vmem:[#allocation2 + $0x58] sm:$0xff]
        %v362 = vld [vmem:[#allocation2 + $0x60] sm:$0xff]
        %v363 = vld [vmem:[#allocation2 + $0x68] sm:$0xff]
        %v364 = vld [vmem:[#allocation2 + $0x70] sm:$0xff]
        %v365 = vld [vmem:[#allocation2 + $0x78] sm:$0xff]
        %v366 = vld [vmem:[#allocation2 + $0x80] sm:$0xff]
        %v367 = vld [vmem:[#allocation2 + $0x88] sm:$0xff]
        %v368 = vld [vmem:[#allocation2 + $0x90] sm:$0xff]
        %v369 = vld [vmem:[#allocation2 + $0x98] sm:$0xff]
        %v370 = vld [vmem:[#allocation2 + $0xa0] sm:$0xff]
        %v371 = vld [vmem:[#allocation2 + $0xa8] sm:$0xff]
        %v372 = vld [vmem:[#allocation2 + $0xb0] sm:$0xff]
        %v373 = vld [vmem:[#allocation2 + $0xb8] sm:$0xff]
        %v374 = vld [vmem:[#allocation2 + $0xc0] sm:$0xff]
        %v375 = vld [vmem:[#allocation2 + $0xc8] sm:$0xff]
        %v376 = vld [vmem:[#allocation2 + $0xd0] sm:$0xff]
        %v377 = vld [vmem:[#allocation2 + $0xd8] sm:$0xff]
        %v378 = vld [vmem:[#allocation2 + $0xe0] sm:$0xff]
        %v379 = vld [vmem:[#allocation2 + $0xe8] sm:$0xff]
        %v380 = vld [vmem:[#allocation2 + $0xf0] sm:$0xff]
        %v381 = vld [vmem:[#allocation2 + $0xf8] sm:$0xff]
        %v382 = vld [vmem:[%s4] sm:$0x3]
        %v384 = vperm.slane %v382, 0
        %v385 = vperm.slane %v382, 1
        %v420 = vunpack.c.l.b16 %v350
        %v421 = vunpack.c.h.b16 %v350
        %v422 = vunpack.c.l.b16 %v351
        %v423 = vunpack.c.h.b16 %v351
        %v424 = vunpack.c.l.b16 %v352
        %v425 = vunpack.c.h.b16 %v352
        %v426 = vunpack.c.l.b16 %v353
        %v427 = vunpack.c.h.b16 %v353
        %v428 = vunpack.c.l.b16 %v354
        %v429 = vunpack.c.h.b16 %v354
        %v430 = vunpack.c.l.b16 %v355
        %v431 = vunpack.c.h.b16 %v355
        %v432 = vunpack.c.l.b16 %v356
        %v433 = vunpack.c.h.b16 %v356
        %v434 = vunpack.c.l.b16 %v357
        %v435 = vunpack.c.h.b16 %v357
        %v436 = vunpack.c.l.b16 %v358
        %v437 = vunpack.c.h.b16 %v358
        %v438 = vunpack.c.l.b16 %v359
        %v439 = vunpack.c.h.b16 %v359
        %v440 = vunpack.c.l.b16 %v360
        %v441 = vunpack.c.h.b16 %v360
        %v442 = vunpack.c.l.b16 %v361
        %v443 = vunpack.c.h.b16 %v361
        %v444 = vunpack.c.l.b16 %v362
        %v445 = vunpack.c.h.b16 %v362
        %v446 = vunpack.c.l.b16 %v363
        %v447 = vunpack.c.h.b16 %v363
        %v448 = vunpack.c.l.b16 %v364
        %v449 = vunpack.c.h.b16 %v364
        %v450 = vunpack.c.l.b16 %v365
        %v451 = vunpack.c.h.b16 %v365
        %v452 = vunpack.c.l.b16 %v366
        %v453 = vunpack.c.h.b16 %v366
        %v454 = vunpack.c.l.b16 %v367
        %v455 = vunpack.c.h.b16 %v367
        %v456 = vunpack.c.l.b16 %v368
        %v457 = vunpack.c.h.b16 %v368
        %v458 = vunpack.c.l.b16 %v369
        %v459 = vunpack.c.h.b16 %v369
        %v460 = vunpack.c.l.b16 %v370
        %v461 = vunpack.c.h.b16 %v370
        %v462 = vunpack.c.l.b16 %v371
        %v463 = vunpack.c.h.b16 %v371
        %v464 = vunpack.c.l.b16 %v372
        %v465 = vunpack.c.h.b16 %v372
        %v466 = vunpack.c.l.b16 %v373
        %v467 = vunpack.c.h.b16 %v373
        %v468 = vunpack.c.l.b16 %v374
        %v469 = vunpack.c.h.b16 %v374
        %v470 = vunpack.c.l.b16 %v375
        %v471 = vunpack.c.h.b16 %v375
        %v472 = vunpack.c.l.b16 %v376
        %v473 = vunpack.c.h.b16 %v376
        %v474 = vunpack.c.l.b16 %v377
        %v475 = vunpack.c.h.b16 %v377
        %v476 = vunpack.c.l.b16 %v378
        %v477 = vunpack.c.h.b16 %v378
        %v478 = vunpack.c.l.b16 %v379
        %v479 = vunpack.c.h.b16 %v379
        %v480 = vunpack.c.l.b16 %v380
        %v481 = vunpack.c.h.b16 %v380
        %v482 = vunpack.c.l.b16 %v381
        %v483 = vunpack.c.h.b16 %v381
        %v484 = vpack.c.b16 %v422, %v420
        %v485 = vpack.c.b16 %v423, %v421
        %v486 = vpack.c.b16 %v426, %v424
        %v487 = vpack.c.b16 %v427, %v425
        %v488 = vpack.c.b16 %v430, %v428
        %v489 = vpack.c.b16 %v431, %v429
        %v490 = vpack.c.b16 %v434, %v432
        %v491 = vpack.c.b16 %v435, %v433
        %v492 = vpack.c.b16 %v438, %v436
        %v493 = vpack.c.b16 %v439, %v437
        %v494 = vpack.c.b16 %v442, %v440
        %v495 = vpack.c.b16 %v443, %v441
        %v496 = vpack.c.b16 %v446, %v444
        %v497 = vpack.c.b16 %v447, %v445
        %v498 = vpack.c.b16 %v450, %v448
        %v499 = vpack.c.b16 %v451, %v449
        %v500 = vpack.c.b16 %v454, %v452
        %v501 = vpack.c.b16 %v455, %v453
        %v502 = vpack.c.b16 %v458, %v456
        %v503 = vpack.c.b16 %v459, %v457
        %v504 = vpack.c.b16 %v462, %v460
        %v505 = vpack.c.b16 %v463, %v461
        %v506 = vpack.c.b16 %v466, %v464
        %v507 = vpack.c.b16 %v467, %v465
        %v508 = vpack.c.b16 %v470, %v468
        %v509 = vpack.c.b16 %v471, %v469
        %v510 = vpack.c.b16 %v474, %v472
        %v511 = vpack.c.b16 %v475, %v473
        %v512 = vpack.c.b16 %v478, %v476
        %v513 = vpack.c.b16 %v479, %v477
        %v514 = vpack.c.b16 %v482, %v480
        %v515 = vpack.c.b16 %v483, %v481
        %548 = vmatpush.bf16.msra.mxu0 %v498
        %549 = vmatpush.bf16.msra.mxu0 %v496
        %550 = vmatpush.bf16.msra.mxu0 %v494
        %551 = vmatpush.bf16.msra.mxu0 %v492
        %552 = vmatpush.bf16.msra.mxu0 %v490
        %553 = vmatpush.bf16.msra.mxu0 %v488
        %554 = vmatpush.bf16.msra.mxu0 %v486
        %555 = vmatpush.bf16.msra.mxu0 %v484
        %556 = vmatmul.bf16.gmra.mxu0 %v348
        %v557 = vpop.f32.mrf.mxu0
        %v558 = vadd.f32 %v384, %v557
        %v559 = vpop.f32.mrf.mxu0
        %560 = vdwg.mxu0
        %561 = vmatpush.bf16.msra.mxu0 %v514
        %562 = vmatpush.bf16.msra.mxu0 %v512
        %563 = vmatpush.bf16.msra.mxu0 %v510
        %564 = vmatpush.bf16.msra.mxu0 %v508
        %565 = vmatpush.bf16.msra.mxu0 %v506
        %566 = vmatpush.bf16.msra.mxu0 %v504
        %567 = vmatpush.bf16.msra.mxu0 %v502
        %568 = vmatpush.bf16.msra.mxu0 %v500
        %569 = vmatmul.bf16.gmra.mxu0 %v349
        %v570 = vpop.f32.mrf.mxu0
        %v571 = vadd.f32 %v558, %v570
        %v572 = vpop.f32.mrf.mxu0
        %573 = vdwg.mxu0
        %574 = vmatpush.bf16.msra.mxu0 %v499
        %575 = vmatpush.bf16.msra.mxu0 %v497
        %576 = vmatpush.bf16.msra.mxu0 %v495
        %577 = vmatpush.bf16.msra.mxu0 %v493
        %578 = vmatpush.bf16.msra.mxu0 %v491
        %579 = vmatpush.bf16.msra.mxu0 %v489
        %580 = vmatpush.bf16.msra.mxu0 %v487
        %581 = vmatpush.bf16.msra.mxu0 %v485
        %582 = vmatmul.bf16.gmra.mxu0 %v348
        %v583 = vpop.f32.mrf.mxu0
        %v584 = vadd.f32 %v385, %v583
        %v585 = vpop.f32.mrf.mxu0
        %586 = vdwg.mxu0
        %587 = vmatpush.bf16.msra.mxu0 %v515
        %588 = vmatpush.bf16.msra.mxu0 %v513
        %589 = vmatpush.bf16.msra.mxu0 %v511
        %590 = vmatpush.bf16.msra.mxu0 %v509
        %591 = vmatpush.bf16.msra.mxu0 %v507
        %592 = vmatpush.bf16.msra.mxu0 %v505
        %593 = vmatpush.bf16.msra.mxu0 %v503
        %594 = vmatpush.bf16.msra.mxu0 %v501
        %595 = vmatmul.bf16.gmra.mxu0 %v349
        %v596 = vpop.f32.mrf.mxu0
        %v597 = vadd.f32 %v584, %v596
        %v598 = vpop.f32.mrf.mxu0
        %599 = vdwg.mxu0
        %v600 = vmax.f32 %v571, 0.0
        %v601 = vmax.f32 %v597, 0.0
        %v602 = vpack.c.bf16 %v600, %v600
        %v603 = vpack.c.bf16 %v601, %v601
        %v604 = vld [vmem:[%s5] sm:$0xf]
        %v605 = vld [vmem:[%s5 + $0x4] sm:$0xf]
        %v606 = vld [vmem:[%s5 + $0x8] sm:$0xf]
        %v607 = vld [vmem:[%s5 + $0xc] sm:$0xf]
        %v608 = vld [vmem:[%s5 + $0x10] sm:$0xf]
        %v609 = vld [vmem:[%s5 + $0x14] sm:$0xf]
        %v610 = vld [vmem:[%s5 + $0x18] sm:$0xf]
        %v611 = vld [vmem:[%s5 + $0x1c] sm:$0xf]
        %v612 = vld [vmem:[%s5 + $0x20] sm:$0xf]
        %v613 = vld [vmem:[%s5 + $0x24] sm:$0xf]
        %v614 = vld [vmem:[%s5 + $0x28] sm:$0xf]
        %v615 = vld [vmem:[%s5 + $0x2c] sm:$0xf]
        %v616 = vld [vmem:[%s5 + $0x30] sm:$0xf]
        %v617 = vld [vmem:[%s5 + $0x34] sm:$0xf]
        %v618 = vld [vmem:[%s5 + $0x38] sm:$0xf]
        %v619 = vld [vmem:[%s5 + $0x3c] sm:$0xf]
        %v620 = vld [vmem:[%s5 + $0x40] sm:$0xf]
        %v621 = vld [vmem:[%s5 + $0x44] sm:$0xf]
        %v622 = vld [vmem:[%s5 + $0x48] sm:$0xf]
        %v623 = vld [vmem:[%s5 + $0x4c] sm:$0xf]
        %v624 = vld [vmem:[%s5 + $0x50] sm:$0xf]
        %v625 = vld [vmem:[%s5 + $0x54] sm:$0xf]
        %v626 = vld [vmem:[%s5 + $0x58] sm:$0xf]
        %v627 = vld [vmem:[%s5 + $0x5c] sm:$0xf]
        %v628 = vld [vmem:[%s5 + $0x60] sm:$0xf]
        %v629 = vld [vmem:[%s5 + $0x64] sm:$0xf]
        %v630 = vld [vmem:[%s5 + $0x68] sm:$0xf]
        %v631 = vld [vmem:[%s5 + $0x6c] sm:$0xf]
        %v632 = vld [vmem:[%s5 + $0x70] sm:$0xf]
        %v633 = vld [vmem:[%s5 + $0x74] sm:$0xf]
        %v634 = vld [vmem:[%s5 + $0x78] sm:$0xf]
        %v635 = vld [vmem:[%s5 + $0x7c] sm:$0xf]
        %v636 = vld [vmem:[%s6] sm:$0x1]
        %v638 = vperm.slane %v636, 0
        %v672 = vunpack.c.l.b16 %v604
        %v673 = vunpack.c.l.b16 %v605
        %v674 = vunpack.c.l.b16 %v606
        %v675 = vunpack.c.l.b16 %v607
        %v676 = vunpack.c.l.b16 %v608
        %v677 = vunpack.c.l.b16 %v609
        %v678 = vunpack.c.l.b16 %v610
        %v679 = vunpack.c.l.b16 %v611
        %v680 = vunpack.c.l.b16 %v612
        %v681 = vunpack.c.l.b16 %v613
        %v682 = vunpack.c.l.b16 %v614
        %v683 = vunpack.c.l.b16 %v615
        %v684 = vunpack.c.l.b16 %v616
        %v685 = vunpack.c.l.b16 %v617
        %v686 = vunpack.c.l.b16 %v618
        %v687 = vunpack.c.l.b16 %v619
        %v688 = vunpack.c.l.b16 %v620
        %v689 = vunpack.c.l.b16 %v621
        %v690 = vunpack.c.l.b16 %v622
        %v691 = vunpack.c.l.b16 %v623
        %v692 = vunpack.c.l.b16 %v624
        %v693 = vunpack.c.l.b16 %v625
        %v694 = vunpack.c.l.b16 %v626
        %v695 = vunpack.c.l.b16 %v627
        %v696 = vunpack.c.l.b16 %v628
        %v697 = vunpack.c.l.b16 %v629
        %v698 = vunpack.c.l.b16 %v630
        %v699 = vunpack.c.l.b16 %v631
        %v700 = vunpack.c.l.b16 %v632
        %v701 = vunpack.c.l.b16 %v633
        %v702 = vunpack.c.l.b16 %v634
        %v703 = vunpack.c.l.b16 %v635
        %v704 = vpack.c.b16 %v673, %v672
        %v705 = vpack.c.b16 %v675, %v674
        %v706 = vpack.c.b16 %v677, %v676
        %v707 = vpack.c.b16 %v679, %v678
        %v708 = vpack.c.b16 %v681, %v680
        %v709 = vpack.c.b16 %v683, %v682
        %v710 = vpack.c.b16 %v685, %v684
        %v711 = vpack.c.b16 %v687, %v686
        %v712 = vpack.c.b16 %v689, %v688
        %v713 = vpack.c.b16 %v691, %v690
        %v714 = vpack.c.b16 %v693, %v692
        %v715 = vpack.c.b16 %v695, %v694
        %v716 = vpack.c.b16 %v697, %v696
        %v717 = vpack.c.b16 %v699, %v698
        %v718 = vpack.c.b16 %v701, %v700
        %v719 = vpack.c.b16 %v703, %v702
        %736 = vmatpush.bf16.msra.mxu0 %v711
        %737 = vmatpush.bf16.msra.mxu0 %v710
        %738 = vmatpush.bf16.msra.mxu0 %v709
        %739 = vmatpush.bf16.msra.mxu0 %v708
        %740 = vmatpush.bf16.msra.mxu0 %v707
        %741 = vmatpush.bf16.msra.mxu0 %v706
        %742 = vmatpush.bf16.msra.mxu0 %v705
        %743 = vmatpush.bf16.msra.mxu0 %v704
        %744 = vmatmul.bf16.gmra.mxu0 %v602
        %v745 = vpop.f32.mrf.mxu0
        %v746 = vadd.f32 %v638, %v745
        %v747 = vpop.f32.mrf.mxu0
        %748 = vdwg.mxu0
        %749 = vmatpush.bf16.msra.mxu0 %v719
        %750 = vmatpush.bf16.msra.mxu0 %v718
        %751 = vmatpush.bf16.msra.mxu0 %v717
        %752 = vmatpush.bf16.msra.mxu0 %v716
        %753 = vmatpush.bf16.msra.mxu0 %v715
        %754 = vmatpush.bf16.msra.mxu0 %v714
        %755 = vmatpush.bf16.msra.mxu0 %v713
        %756 = vmatpush.bf16.msra.mxu0 %v712
        %757 = vmatmul.bf16.gmra.mxu0 %v603
        %v758 = vpop.f32.mrf.mxu0
        %v759 = vadd.f32 %v746, %v758
        %v760 = vpop.f32.mrf.mxu0
        %761 = vdwg.mxu0
        %763 = vrot.lane.b32.xlu0 %v759, 120
        %v764 = vpop.permute.xlu0 %763
        %v766 = vmax.f32 %v759, %v764
        %v767 = vsub.f32 %v759, %v766
        %v768 = vmul.f32 %v767, 1.442695
        %v769 = vpow.pop %v768
        %771 = vrot.lane.b32.xlu0 %v766, 8
        %v772 = vpop.permute.xlu0 %771
        %v774 = vsub.f32 %v759, %v772
        %v775 = vmul.f32 %v774, 1.442695
        %v776 = vpow.pop %v775
        %778 = vrot.lane.b32.xlu0 %v776, 120
        %v779 = vpop.permute.xlu0 %778
        %v781 = vadd.f32 %v769, %v779
        %v782 = vrcp.pop %v781
        %v783 = vmul.f32 %v781, %v782
        %v784 = vsub.f32 1.0, %v783
        %v785 = vmul.f32 %v782, %v784
        %v786 = vadd.f32 %v782, %v785
        %vm787 = vweird.f32 %v781
        %vm788 = vweird.f32 %v782
        %vm789 = vmor %vm787, %vm788
        %v790 = vsel %vm789, %v782, %v786
        %v791 = vand.u32 2147483647, %v781
        %vm792 = vcmp.eq.f32.partialorder %v791, 8.507059e+37
        %v793 = vand.u32 %v781, 2147483648
        %v794 = vor.u32 1.1754944e-38, %v793
        %v795 = vsel %vm792, %v794, %v790
        %v796 = vmul.f32 %v769, %v795
        %vm797 = vcmask 64512
        %798 = vst.msk [vmem:[%s290] sm:$0xff] %vm797, %v796
        %p799 = scmp.lt.s32.totalorder %s19, 1
        %s800 = scalar_select %p799, %s19, 1
        %s801 = smul.addr %s800, 8
        %s802 = scalar_lea.vmem %s7, %s801
        // Predicated region
        $region53: #{tpu_custom_call.1} parent=47 // pred_check
          %p803 = pneg %p189
        $region54: #{tpu_custom_call.1} parent=47 // pred_check_branch
          %805 = sbr.rel (%p803) target = $region56
        $region55: #{tpu_custom_call.1} parent=47 // pred_region
          _
        $region56: #{tpu_custom_call.1} parent=47 // pred_fallthru
          _
      $region48: #{tpu_custom_call.1} parent=5 // pred_fallthru
        _
      %p806 = scmp.le.s32.totalorder 2, %s14
      // Predicated region
      $region57: #{tpu_custom_call.1} parent=5 // pred_check
        %p807 = pneg %p806
      $region58: #{tpu_custom_call.1} parent=5 // pred_check_branch
        %809 = sbr.rel (%p807) target = $region60
      $region59: #{tpu_custom_call.1} parent=5 // pred_region
        %s810 = ssub.s32 %s14, 2
        // Predicated region
        $region61: #{tpu_custom_call.1} parent=59 // pred_check
          %p811 = pneg %p195
        $region62: #{tpu_custom_call.1} parent=59 // pred_check_branch
          %813 = sbr.rel (%p811) target = $region64
        $region63: #{tpu_custom_call.1} parent=59 // pred_region
          %p814 = scmp.lt.s32.totalorder %s20, 1
          %s815 = scalar_select %p814, %s20, 1
          %s816 = smul.addr %s815, 8
          %s817 = scalar_lea.vmem %s7, %s816
        $region64: #{tpu_custom_call.1} parent=59 // pred_fallthru
          _
      $region60: #{tpu_custom_call.1} parent=5 // pred_fallthru
        _
    $region6: #{tpu_custom_call.1} parent=1 // loop_footer
      %s18 = sadd.s32 1, %s14
    $region7: #{tpu_custom_call.1} parent=1 // loop_footer_branch
      %13 = sbr.rel target = $region3
    $region8: #{tpu_custom_call.1} parent=1 // loop_exit
      _
    %818 = vsyncpa [#allocation3], 1
    %s819 = scalar_lea.sflag [#allocation3], 1
    %820 = vsyncpa %s819, 1

</llo_original>
